<compile_context>
chip_gen: v5e
topology: v5e:2x2
jax: 0.10.0
libtpu: 0.0.40
codegen_flags: <defaults>
</compile_context>

<pallas_src>
import functools

import jax
import jax.numpy as jnp
from jax.experimental import pallas as pl
from jax.experimental.pallas import tpu as pltpu


# --------------------------------------------------------------------------
# Kernel 1: camera transform + perspective projection (lane-dense layout)
# --------------------------------------------------------------------------
def project_kernel(mesh_ref, R_ref, t_ref, focal_ref, princpt_ref, o_ref):
    mesh = mesh_ref[0]        # (3, V)   V on the lane axis
    Rm = R_ref[0]             # (3, 3)
    tv = t_ref[0]             # (3, 1)
    foc = focal_ref[0]        # (2, 1)
    pp = princpt_ref[0]       # (2, 1)

    mx = mesh[0:1, :]
    my = mesh[1:2, :]
    mz = mesh[2:3, :]

    cam_x = Rm[0:1, 0:1] * mx + Rm[0:1, 1:2] * my + Rm[0:1, 2:3] * mz + tv[0:1, 0:1]
    cam_y = Rm[1:2, 0:1] * mx + Rm[1:2, 1:2] * my + Rm[1:2, 2:3] * mz + tv[1:2, 0:1]
    cam_z = Rm[2:3, 0:1] * mx + Rm[2:3, 1:2] * my + Rm[2:3, 2:3] * mz + tv[2:3, 0:1]

    # one reciprocal on the EUP, two muls on the VPU (approx=True would also
    # pass the 1e-2 tolerance but exact keeps floor() corner selection stable)
    inv_z = pl.reciprocal(cam_z, approx=False)
    x = cam_x * inv_z * foc[0:1, 0:1] + pp[0:1, 0:1]   # (1, V)
    y = cam_y * inv_z * foc[1:2, 0:1] + pp[1:2, 0:1]   # (1, V)

    o_ref[0, 0:1, :] = x
    o_ref[0, 1:2, :] = y


def project(mesh_t, R, t, focal, princpt):
    B, _, V = mesh_t.shape
    return pl.pallas_call(
        project_kernel,
        out_shape=jax.ShapeDtypeStruct((B, 2, V), jnp.float32),
        grid_spec=pltpu.PrefetchScalarGridSpec(
            num_scalar_prefetch=0,
            grid=(B,),
            in_specs=[
                pl.BlockSpec((1, 3, V), lambda b: (b, 0, 0)),
                pl.BlockSpec((1, 3, 3), lambda b: (b, 0, 0)),
                pl.BlockSpec((1, 3, 1), lambda b: (b, 0, 0)),
                pl.BlockSpec((1, 2, 1), lambda b: (b, 0, 0)),
                pl.BlockSpec((1, 2, 1), lambda b: (b, 0, 0)),
            ],
            out_specs=pl.BlockSpec((1, 2, V), lambda b: (b, 0, 0)),
        ),
        compiler_params=pltpu.CompilerParams(dimension_semantics=("parallel",)),
    )(mesh_t, R, t, focal, princpt)


# --------------------------------------------------------------------------
# Kernel 2: barycentric interp + grid_sample (bilinear, align_corners=True,
#           zero padding) via 4 in-VMEM gathers + masking
# --------------------------------------------------------------------------
def uv_sample_kernel(verts_ref, bary_ref, img_hbm, invuv_ref, invis_ref, o_ref,
                     img_vmem, copy_sem, *, H, W, use_gather):
    b = pl.program_id(0)
    j = pl.program_id(1)

    # Copy the whole image for batch b into a single-buffered VMEM scratch
    # once; it stays resident across the inner UV-tile axis (j).
    @pl.when(j == 0)
    def _():
        cp = pltpu.make_async_copy(img_hbm.at[b], img_vmem, copy_sem.at[0])
        cp.start()
        cp.wait()

    verts = verts_ref[0]      # (6, TN) rows: x0,x1,x2,y0,y1,y2
    bary = bary_ref[0]        # (3, TN)
    invuv = invuv_ref[0]      # (1, TN)  pix_to_face_uv == -1
    invis = invis_ref[0]      # (1, TN)  invisible face mask
    img2d = img_vmem[...]     # (C, HW)  resident image

    nc = img2d.shape[0]
    hw = img2d.shape[1]
    tn = verts.shape[1]

    b0 = bary[0:1, :]
    b1 = bary[1:2, :]
    b2 = bary[2:3, :]
    # barycentric interpolation of projected image coords (pixel units; the
    # /(W-1)*2-1 normalization + align_corners denormalization is identity)
    x = verts[0:1, :] * b0 + verts[1:2, :] * b1 + verts[2:3, :] * b2   # (1, TN)
    y = verts[3:4, :] * b0 + verts[4:5, :] * b1 + verts[5:6, :] * b2   # (1, TN)

    x0 = jnp.floor(x)
    y0 = jnp.floor(y)
    x1 = x0 + 1.0
    y1 = y0 + 1.0
    wx1 = x - x0
    wx0 = 1.0 - wx1
    wy1 = y - y0
    wy0 = 1.0 - wy1

    if use_gather:
        def corner(xc, yc, w):
            inb = (xc >= 0.0) & (xc <= W - 1.0) & (yc >= 0.0) & (yc <= H - 1.0)
            w = jnp.where(inb, w, 0.0)                      # zero padding OOB
            q = jnp.clip((yc * W + xc).astype(jnp.int32), 0, hw - 1)
            vals = jnp.take_along_axis(
                img2d, jnp.broadcast_to(q, (nc, tn)), axis=1,
                mode="promise_in_bounds")                   # (C, TN) gather
            return vals * w

        sampled = (corner(x0, y0, wx0 * wy0) + corner(x1, y0, wx1 * wy0)
                   + corner(x0, y1, wx0 * wy1) + corner(x1, y1, wx1 * wy1))
    else:
        # TODO(synk): compatibility path only — for Mosaic builds that cannot
        # lower the in-kernel vector gather; one-hot bilinear weights on the
        # MXU (O(C*HW*TN), (HW, TN) intermediate).
        iota = jax.lax.broadcasted_iota(jnp.int32, (hw, tn), 0)

        def onehot(xc, yc, w):
            inb = (xc >= 0.0) & (xc <= W - 1.0) & (yc >= 0.0) & (yc <= H - 1.0)
            w = jnp.where(inb, w, 0.0)
            q = (yc * W + xc).astype(jnp.int32)
            return jnp.where(iota == q, w, 0.0)

        wmat = (onehot(x0, y0, wx0 * wy0) + onehot(x1, y0, wx1 * wy0)
                + onehot(x0, y1, wx0 * wy1) + onehot(x1, y1, wx1 * wy1))
        sampled = jnp.dot(img2d, wmat, preferred_element_type=jnp.float32)

    # uvmap[pix_to_face_uv == -1] = -1
    sampled = jnp.where(invuv > 0.5, -1.0, sampled)
    # uvmap = uvmap * (1 - invisible) - invisible
    sampled = sampled * (1.0 - invis) - invis

    o_ref[0, :, :] = sampled.astype(o_ref.dtype)


def _uv_sample_call(verts, bary, img_flat, invuv, invis, H, W, tn, use_gather):
    B, C, HW = img_flat.shape
    N = verts.shape[2]
    assert N % tn == 0 and tn % 128 == 0

    kernel = functools.partial(uv_sample_kernel, H=H, W=W, use_gather=use_gather)

    # Explicit VMEM budget: resident image (single buffer) + double-buffered
    # per-tile blocks + slack; capped with headroom below v7x's 64 MiB.
    img_bytes = C * HW * 4
    blk_bytes = 2 * ((6 + 3 + 1 + 1) * tn + C * tn) * 4
    vmem_limit = int(min(56 * 1024 * 1024,
                         max(16 * 1024 * 1024, img_bytes + blk_bytes + (2 << 20))))

    return pl.pallas_call(
        kernel,
        out_shape=jax.ShapeDtypeStruct((B, C, N), jnp.float32),
        grid_spec=pltpu.PrefetchScalarGridSpec(
            num_scalar_prefetch=0,
            grid=(B, N // tn),                       # b outer, UV tiles inner
            in_specs=[
                pl.BlockSpec((1, 6, tn), lambda b, j: (b, 0, j)),
                pl.BlockSpec((1, 3, tn), lambda b, j: (0, 0, j)),
                pl.BlockSpec(memory_space=pl.ANY),   # image stays in HBM
                pl.BlockSpec((1, 1, tn), lambda b, j: (0, 0, j)),
                pl.BlockSpec((1, 1, tn), lambda b, j: (b, 0, j)),
            ],
            out_specs=pl.BlockSpec((1, C, tn), lambda b, j: (b, 0, j)),
            scratch_shapes=[
                pltpu.VMEM((C, HW), jnp.float32),    # resident image, 1 buffer
                pltpu.SemaphoreType.DMA((1,)),
            ],
        ),
        compiler_params=pltpu.CompilerParams(
            # b is megacore-parallel; the UV-tile axis stays sequential per b
            # because the resident-image copy is keyed on j == 0.
            dimension_semantics=("parallel", "arbitrary"),
            vmem_limit_bytes=vmem_limit,
        ),
    )(verts, bary, img_flat, invuv, invis)


def uv_sample(verts, bary, img_flat, invuv, invis, H, W, tn):
    try:
        return _uv_sample_call(verts, bary, img_flat, invuv, invis, H, W, tn,
                               use_gather=True)
    except Exception:  # noqa: BLE001
        # TODO(synk): Mosaic build without vector dynamic-gather support —
        # fall back to the (slower) one-hot-matmul formulation.
        return _uv_sample_call(verts, bary, img_flat, invuv, invis, H, W, tn,
                               use_gather=False)


def _pick_tile(n, cap=512):
    best = None
    for t in range(128, min(n, cap) + 1, 128):
        if n % t == 0:
            best = t
    if best is None:
        # TODO(synk): pad N (= UH*UW) to a multiple of 128 for arbitrary UV maps.
        raise ValueError(f"UV pixel count {n} must be a multiple of 128")
    return best


# --------------------------------------------------------------------------
# Forward pass (Pallas kernels + JAX glue for the index gathers)
# --------------------------------------------------------------------------
def xy2uv_forward(img, mesh, face, focal, princpt, p2f_xy, p2f_uv, bary_uv,
                  R=None, t=None):
    B, C, H, W = img.shape
    V = mesh.shape[1]
    Fc = face.shape[0]
    UH, UW = p2f_uv.shape
    N = UH * UW

    if R is None:  # cam_param defaults from the torch module
        R = jnp.broadcast_to(jnp.eye(3, dtype=jnp.float32), (B, 3, 3))
    if t is None:
        t = jnp.zeros((B, 3), jnp.float32)

    # Pallas kernel 1 (lane-dense): mesh_cam = R @ mesh + t ; pinhole -> (B,2,V)
    proj = project(mesh.transpose(0, 2, 1), R, t.reshape(B, 3, 1),
                   focal.reshape(B, 2, 1), princpt.reshape(B, 2, 1))
    proj_x = proj[:, 0, :]                                           # (B, V)
    proj_y = proj[:, 1, :]                                           # (B, V)

    # TODO(synk): rasterize_to_xy (PyTorch3D rasterizer) has no Pallas
    # equivalent; visibility comes from the externally supplied pix_to_face_xy.
    # torch.unique + scatter replaced by a vectorized membership test
    # (reproducing the torch negative-index quirk: -1 marks face Fc-1 valid).
    adj = jnp.where(p2f_xy == -1, Fc - 1,
                    p2f_xy - Fc * jnp.arange(B)[:, None, None])
    valid = (adj.reshape(B, 1, -1) ==
             jnp.arange(Fc).reshape(1, Fc, 1)).any(axis=2)           # (B, Fc)
    _face = jnp.where(valid[:, :, None], face[None, :, :], -1)       # (B, Fc, 3)

    puv = p2f_uv.reshape(-1)                                         # (N,)
    puv_w = jnp.where(puv == -1, Fc - 1, puv)                        # torch -1 index
    vidx = _face[:, puv_w, :]                                        # (B, N, 3)
    invisible = (vidx[:, :, 0] == -1).astype(jnp.float32)            # (B, N)
    vidx_w = jnp.where(vidx == -1, V - 1, vidx)                      # torch -1 index

    flat_idx = vidx_w.reshape(B, N * 3)
    gx = jnp.take_along_axis(proj_x, flat_idx, axis=1).reshape(B, N, 3)
    gy = jnp.take_along_axis(proj_y, flat_idx, axis=1).reshape(B, N, 3)
    verts = jnp.concatenate([gx.transpose(0, 2, 1), gy.transpose(0, 2, 1)],
                            axis=1)                                  # (B, 6, N)
    bary = bary_uv.reshape(N, 3).T.reshape(1, 3, N)
    invuv = (puv == -1).astype(jnp.float32).reshape(1, 1, N)
    invis = invisible.reshape(B, 1, N)
    img_flat = img.reshape(B, C, H * W)

    tn = _pick_tile(N)
    out = uv_sample(verts, bary, img_flat, invuv, invis, H, W, tn)   # (B, C, N)
    return out.reshape(B, C, UH, UW)


# --------------------------------------------------------------------------
# Pure-JAX reference (same semantics) for a correctness check
# --------------------------------------------------------------------------
def xy2uv_reference(img, mesh, face, focal, princpt, p2f_xy, p2f_uv, bary_uv):
    B, C, H, W = img.shape
    V = mesh.shape[1]
    Fc = face.shape[0]
    UH, UW = p2f_uv.shape
    N = UH * UW

    R = jnp.broadcast_to(jnp.eye(3, dtype=jnp.float32), (B, 3, 3))
    t = jnp.zeros((B, 3), jnp.float32)
    mesh_cam = jnp.einsum('bij,bvj->bvi', R, mesh) + t[:, None, :]
    x = mesh_cam[..., 0] / mesh_cam[..., 2] * focal[:, None, 0] + princpt[:, None, 0]
    y = mesh_cam[..., 1] / mesh_cam[..., 2] * focal[:, None, 1] + princpt[:, None, 1]
    mesh_img = jnp.stack([x, y], axis=-1)                            # (B, V, 2)

    adj = jnp.where(p2f_xy == -1, Fc - 1,
                    p2f_xy - Fc * jnp.arange(B)[:, None, None])
    valid = (adj.reshape(B, 1, -1) ==
             jnp.arange(Fc).reshape(1, Fc, 1)).any(axis=2)
    _face = jnp.where(valid[:, :, None], face[None, :, :], -1)

    puv = p2f_uv.reshape(-1)
    puv_w = jnp.where(puv == -1, Fc - 1, puv)
    vidx = _face[:, puv_w, :]
    invisible = (vidx[:, :, 0] == -1).astype(jnp.float32)
    vidx_w = jnp.where(vidx == -1, V - 1, vidx)

    gathered = mesh_img[jnp.arange(B)[:, None, None], vidx_w, :]     # (B, N, 3, 2)
    mesh_pix = (gathered * bary_uv.reshape(1, N, 3, 1)).sum(axis=2)  # (B, N, 2)
    xs = mesh_pix[..., 0]
    ys = mesh_pix[..., 1]

    x0 = jnp.floor(xs); y0 = jnp.floor(ys); x1 = x0 + 1.0; y1 = y0 + 1.0
    wx1 = xs - x0; wx0 = 1.0 - wx1
    wy1 = ys - y0; wy0 = 1.0 - wy1
    img_f = img.reshape(B, C, H * W)

    def corner(xc, yc, w):
        inb = (xc >= 0) & (xc <= W - 1) & (yc >= 0) & (yc <= H - 1)
        q = jnp.clip((yc * W + xc).astype(jnp.int32), 0, H * W - 1)
        val = jnp.take_along_axis(
            img_f, jnp.broadcast_to(q[:, None, :], (B, C, N)), axis=2)
        return jnp.where(inb[:, None, :], w[:, None, :], 0.0) * val

    samp = (corner(x0, y0, wx0 * wy0) + corner(x1, y0, wx1 * wy0)
            + corner(x0, y1, wx0 * wy1) + corner(x1, y1, wx1 * wy1))
    invuv = (puv == -1).astype(jnp.float32).reshape(1, 1, N)
    samp = jnp.where(invuv > 0.5, -1.0, samp)
    samp = samp * (1.0 - invisible[:, None, :]) - invisible[:, None, :]
    return samp.reshape(B, C, UH, UW)


if __name__ == "__main__":
    key = jax.random.PRNGKey(0)
    ks = jax.random.split(key, 8)

    B, C, H, W = 2, 4, 16, 16
    V, Fc = 64, 32
    UH, UW = 16, 16

    img = jax.random.normal(ks[0], (B, C, H, W), jnp.float32)
    mesh_xy = jax.random.uniform(ks[1], (B, V, 2), jnp.float32, -1.0, 1.0)
    mesh_z = jax.random.uniform(ks[2], (B, V, 1), jnp.float32, 2.0, 4.0)
    mesh = jnp.concatenate([mesh_xy, mesh_z], axis=-1)
    face = jax.random.randint(ks[3], (Fc, 3), 0, V, jnp.int32)
    focal = jnp.full((B, 2), 24.0, jnp.float32)
    princpt = jnp.full((B, 2), 7.5, jnp.float32)

    # Synthetic rasterizer outputs (deterministic; see TODO above):
    p2f_uv = jax.random.randint(ks[4], (UH, UW), -1, Fc, jnp.int32)
    bc = jax.random.uniform(ks[5], (UH, UW, 3), jnp.float32, 0.1, 1.0)
    bary_uv = bc / bc.sum(-1, keepdims=True)
    base = jax.random.randint(ks[6], (B, H, W), -1, Fc, jnp.int32)
    p2f_xy = jnp.where(base == -1, -1,
                       base + Fc * jnp.arange(B)[:, None, None]).astype(jnp.int32)

    uvmap = xy2uv_forward(img, mesh, face, focal, princpt, p2f_xy, p2f_uv, bary_uv)
    uvmap = jax.block_until_ready(uvmap)

    ref = xy2uv_reference(img, mesh, face, focal, princpt, p2f_xy, p2f_uv, bary_uv)
    assert uvmap.shape == (B, C, UH, UW)
    max_err = float(jnp.abs(uvmap - ref).max())
    assert jnp.allclose(uvmap, ref, rtol=1e-2, atol=1e-2), max_err

    print("KERNEL_OK")
</pallas_src>

<mosaic_0001>
module attributes {stable_mosaic.version = 11 : i64} {
  func.func @project_kernel(%arg0: i32, %arg1: memref<1x3x64xf32, #tpu.memory_space<vmem>>, %arg2: memref<1x3x3xf32, #tpu.memory_space<vmem>>, %arg3: memref<1x3x1xf32, #tpu.memory_space<vmem>>, %arg4: memref<1x2x1xf32, #tpu.memory_space<vmem>>, %arg5: memref<1x2x1xf32, #tpu.memory_space<vmem>>, %arg6: memref<1x2x64xf32, #tpu.memory_space<vmem>>) attributes {dimension_semantics = [#tpu.dimension_semantics<parallel>], iteration_bounds = array<i64: 2>, scalar_prefetch = 0 : i64, scratch_operands = 0 : i64, tpu.core_type = #tpu.core_type<tc>, window_params = [{transform_indices = @transform_0, window_bounds = array<i64: 1, 3, 64>}, {transform_indices = @transform_1, window_bounds = array<i64: 1, 3, 3>}, {transform_indices = @transform_2, window_bounds = array<i64: 1, 3, 1>}, {transform_indices = @transform_3, window_bounds = array<i64: 1, 2, 1>}, {transform_indices = @transform_4, window_bounds = array<i64: 1, 2, 1>}, {transform_indices = @transform_5, window_bounds = array<i64: 1, 2, 64>}]} {
    %c0 = arith.constant 0 : index
    %c0_0 = arith.constant 0 : index
    %c0_1 = arith.constant 0 : index
    %0 = vector.load %arg1[%c0, %c0_0, %c0_1] : memref<1x3x64xf32, #tpu.memory_space<vmem>>, vector<1x3x64xf32>
    %1 = vector.shape_cast %0 : vector<1x3x64xf32> to vector<3x64xf32>
    %c0_2 = arith.constant 0 : index
    %c0_3 = arith.constant 0 : index
    %c0_4 = arith.constant 0 : index
    %2 = vector.load %arg2[%c0_2, %c0_3, %c0_4] : memref<1x3x3xf32, #tpu.memory_space<vmem>>, vector<1x3x3xf32>
    %3 = vector.shape_cast %2 : vector<1x3x3xf32> to vector<3x3xf32>
    %c0_5 = arith.constant 0 : index
    %c0_6 = arith.constant 0 : index
    %c0_7 = arith.constant 0 : index
    %4 = vector.load %arg3[%c0_5, %c0_6, %c0_7] : memref<1x3x1xf32, #tpu.memory_space<vmem>>, vector<1x3x1xf32>
    %5 = vector.shape_cast %4 : vector<1x3x1xf32> to vector<3x1xf32>
    %c0_8 = arith.constant 0 : index
    %c0_9 = arith.constant 0 : index
    %c0_10 = arith.constant 0 : index
    %6 = vector.load %arg4[%c0_8, %c0_9, %c0_10] : memref<1x2x1xf32, #tpu.memory_space<vmem>>, vector<1x2x1xf32>
    %7 = vector.shape_cast %6 : vector<1x2x1xf32> to vector<2x1xf32>
    %c0_11 = arith.constant 0 : index
    %c0_12 = arith.constant 0 : index
    %c0_13 = arith.constant 0 : index
    %8 = vector.load %arg5[%c0_11, %c0_12, %c0_13] : memref<1x2x1xf32, #tpu.memory_space<vmem>>, vector<1x2x1xf32>
    %9 = vector.shape_cast %8 : vector<1x2x1xf32> to vector<2x1xf32>
    %10 = vector.extract_strided_slice %1 {offsets = [0, 0], sizes = [1, 64], strides = [1, 1]} : vector<3x64xf32> to vector<1x64xf32>
    %11 = vector.extract_strided_slice %1 {offsets = [1, 0], sizes = [1, 64], strides = [1, 1]} : vector<3x64xf32> to vector<1x64xf32>
    %12 = vector.extract_strided_slice %1 {offsets = [2, 0], sizes = [1, 64], strides = [1, 1]} : vector<3x64xf32> to vector<1x64xf32>
    %13 = vector.extract_strided_slice %3 {offsets = [0, 0], sizes = [1, 1], strides = [1, 1]} : vector<3x3xf32> to vector<1x1xf32>
    %14 = vector.broadcast %13 : vector<1x1xf32> to vector<1x64xf32>
    %15 = arith.mulf %14, %10 : vector<1x64xf32>
    %16 = vector.extract_strided_slice %3 {offsets = [0, 1], sizes = [1, 1], strides = [1, 1]} : vector<3x3xf32> to vector<1x1xf32>
    %17 = vector.broadcast %16 : vector<1x1xf32> to vector<1x64xf32>
    %18 = arith.mulf %17, %11 : vector<1x64xf32>
    %19 = arith.addf %15, %18 : vector<1x64xf32>
    %20 = vector.extract_strided_slice %3 {offsets = [0, 2], sizes = [1, 1], strides = [1, 1]} : vector<3x3xf32> to vector<1x1xf32>
    %21 = vector.broadcast %20 : vector<1x1xf32> to vector<1x64xf32>
    %22 = arith.mulf %21, %12 : vector<1x64xf32>
    %23 = arith.addf %19, %22 : vector<1x64xf32>
    %24 = vector.extract_strided_slice %5 {offsets = [0, 0], sizes = [1, 1], strides = [1, 1]} : vector<3x1xf32> to vector<1x1xf32>
    %25 = vector.broadcast %24 : vector<1x1xf32> to vector<1x64xf32>
    %26 = arith.addf %23, %25 : vector<1x64xf32>
    %27 = vector.extract_strided_slice %3 {offsets = [1, 0], sizes = [1, 1], strides = [1, 1]} : vector<3x3xf32> to vector<1x1xf32>
    %28 = vector.broadcast %27 : vector<1x1xf32> to vector<1x64xf32>
    %29 = arith.mulf %28, %10 : vector<1x64xf32>
    %30 = vector.extract_strided_slice %3 {offsets = [1, 1], sizes = [1, 1], strides = [1, 1]} : vector<3x3xf32> to vector<1x1xf32>
    %31 = vector.broadcast %30 : vector<1x1xf32> to vector<1x64xf32>
    %32 = arith.mulf %31, %11 : vector<1x64xf32>
    %33 = arith.addf %29, %32 : vector<1x64xf32>
    %34 = vector.extract_strided_slice %3 {offsets = [1, 2], sizes = [1, 1], strides = [1, 1]} : vector<3x3xf32> to vector<1x1xf32>
    %35 = vector.broadcast %34 : vector<1x1xf32> to vector<1x64xf32>
    %36 = arith.mulf %35, %12 : vector<1x64xf32>
    %37 = arith.addf %33, %36 : vector<1x64xf32>
    %38 = vector.extract_strided_slice %5 {offsets = [1, 0], sizes = [1, 1], strides = [1, 1]} : vector<3x1xf32> to vector<1x1xf32>
    %39 = vector.broadcast %38 : vector<1x1xf32> to vector<1x64xf32>
    %40 = arith.addf %37, %39 : vector<1x64xf32>
    %41 = vector.extract_strided_slice %3 {offsets = [2, 0], sizes = [1, 1], strides = [1, 1]} : vector<3x3xf32> to vector<1x1xf32>
    %42 = vector.broadcast %41 : vector<1x1xf32> to vector<1x64xf32>
    %43 = arith.mulf %42, %10 : vector<1x64xf32>
    %44 = vector.extract_strided_slice %3 {offsets = [2, 1], sizes = [1, 1], strides = [1, 1]} : vector<3x3xf32> to vector<1x1xf32>
    %45 = vector.broadcast %44 : vector<1x1xf32> to vector<1x64xf32>
    %46 = arith.mulf %45, %11 : vector<1x64xf32>
    %47 = arith.addf %43, %46 : vector<1x64xf32>
    %48 = vector.extract_strided_slice %3 {offsets = [2, 2], sizes = [1, 1], strides = [1, 1]} : vector<3x3xf32> to vector<1x1xf32>
    %49 = vector.broadcast %48 : vector<1x1xf32> to vector<1x64xf32>
    %50 = arith.mulf %49, %12 : vector<1x64xf32>
    %51 = arith.addf %47, %50 : vector<1x64xf32>
    %52 = vector.extract_strided_slice %5 {offsets = [2, 0], sizes = [1, 1], strides = [1, 1]} : vector<3x1xf32> to vector<1x1xf32>
    %53 = vector.broadcast %52 : vector<1x1xf32> to vector<1x64xf32>
    %54 = arith.addf %51, %53 : vector<1x64xf32>
    %55 = tpu.reciprocal %54 : vector<1x64xf32> -> vector<1x64xf32>
    %56 = arith.mulf %26, %55 : vector<1x64xf32>
    %57 = vector.extract_strided_slice %7 {offsets = [0, 0], sizes = [1, 1], strides = [1, 1]} : vector<2x1xf32> to vector<1x1xf32>
    %58 = vector.broadcast %57 : vector<1x1xf32> to vector<1x64xf32>
    %59 = arith.mulf %56, %58 : vector<1x64xf32>
    %60 = vector.extract_strided_slice %9 {offsets = [0, 0], sizes = [1, 1], strides = [1, 1]} : vector<2x1xf32> to vector<1x1xf32>
    %61 = vector.broadcast %60 : vector<1x1xf32> to vector<1x64xf32>
    %62 = arith.addf %59, %61 : vector<1x64xf32>
    %63 = arith.mulf %40, %55 : vector<1x64xf32>
    %64 = vector.extract_strided_slice %7 {offsets = [1, 0], sizes = [1, 1], strides = [1, 1]} : vector<2x1xf32> to vector<1x1xf32>
    %65 = vector.broadcast %64 : vector<1x1xf32> to vector<1x64xf32>
    %66 = arith.mulf %63, %65 : vector<1x64xf32>
    %67 = vector.extract_strided_slice %9 {offsets = [1, 0], sizes = [1, 1], strides = [1, 1]} : vector<2x1xf32> to vector<1x1xf32>
    %68 = vector.broadcast %67 : vector<1x1xf32> to vector<1x64xf32>
    %69 = arith.addf %66, %68 : vector<1x64xf32>
    %c0_14 = arith.constant 0 : index
    %c0_15 = arith.constant 0 : index
    %c0_16 = arith.constant 0 : index
    %70 = vector.load %arg6[%c0_14, %c0_15, %c0_16] : memref<1x2x64xf32, #tpu.memory_space<vmem>>, vector<1x1x64xf32>
    %71 = vector.shape_cast %70 : vector<1x1x64xf32> to vector<1x64xf32>
    %72 = vector.shape_cast %62 : vector<1x64xf32> to vector<1x1x64xf32>
    tpu.vector_store %arg6[%c0_14, %c0_15, %c0_16], %72 {strides = array<i32>} : memref<1x2x64xf32, #tpu.memory_space<vmem>>, vector<1x1x64xf32>,
    %c0_17 = arith.constant 0 : index
    %c1 = arith.constant 1 : index
    %c0_18 = arith.constant 0 : index
    %73 = vector.load %arg6[%c0_17, %c1, %c0_18] : memref<1x2x64xf32, #tpu.memory_space<vmem>>, vector<1x1x64xf32>
    %74 = vector.shape_cast %73 : vector<1x1x64xf32> to vector<1x64xf32>
    %75 = vector.shape_cast %69 : vector<1x64xf32> to vector<1x1x64xf32>
    tpu.vector_store %arg6[%c0_17, %c1, %c0_18], %75 {strides = array<i32>} : memref<1x2x64xf32, #tpu.memory_space<vmem>>, vector<1x1x64xf32>,
    return
  }
  func.func @transform_0(%arg0: i32) -> (i32, i32, i32) {
    %c0_i32 = arith.constant 0 : i32
    %c0_i32_0 = arith.constant 0 : i32
    %c0_i32_1 = arith.constant 0 : i32
    return %arg0, %c0_i32, %c0_i32_0 : i32, i32, i32
  }
  func.func @transform_1(%arg0: i32) -> (i32, i32, i32) {
    %c0_i32 = arith.constant 0 : i32
    %c0_i32_0 = arith.constant 0 : i32
    %c0_i32_1 = arith.constant 0 : i32
    return %arg0, %c0_i32, %c0_i32_0 : i32, i32, i32
  }
  func.func @transform_2(%arg0: i32) -> (i32, i32, i32) {
    %c0_i32 = arith.constant 0 : i32
    %c0_i32_0 = arith.constant 0 : i32
    %c0_i32_1 = arith.constant 0 : i32
    return %arg0, %c0_i32, %c0_i32_0 : i32, i32, i32
  }
  func.func @transform_3(%arg0: i32) -> (i32, i32, i32) {
    %c0_i32 = arith.constant 0 : i32
    %c0_i32_0 = arith.constant 0 : i32
    %c0_i32_1 = arith.constant 0 : i32
    return %arg0, %c0_i32, %c0_i32_0 : i32, i32, i32
  }
  func.func @transform_4(%arg0: i32) -> (i32, i32, i32) {
    %c0_i32 = arith.constant 0 : i32
    %c0_i32_0 = arith.constant 0 : i32
    %c0_i32_1 = arith.constant 0 : i32
    return %arg0, %c0_i32, %c0_i32_0 : i32, i32, i32
  }
  func.func @transform_5(%arg0: i32) -> (i32, i32, i32) {
    %c0_i32 = arith.constant 0 : i32
    %c0_i32_0 = arith.constant 0 : i32
    %c0_i32_1 = arith.constant 0 : i32
    return %arg0, %c0_i32, %c0_i32_0 : i32, i32, i32
  }
}

</mosaic_0001>

<llo_original>
// kernel: tpu_custom_call.1
$region0: #{tpu_custom_call.1}
  #allocation0 [shape = 'u32[]', space=smem, size = 0x4, offset = 0x4, fixed_abs, tag = 'smem constant byte address 0x4 - core index']
  #allocation1 [shape = 'u32[72,128]{1,0:T(1,128)}', space=vmem, size = 0x9000, scoped, tag = 'internal scratch']
  %s0 = inlined_call_operand.vmem [shape: f32[2,3,64], index: 0, kind: input, shape index: {}]
  %s1 = inlined_call_operand.vmem [shape: f32[2,3,3], index: 1, kind: input, shape index: {}]
  %s2 = inlined_call_operand.vmem [shape: f32[2,3,1], index: 2, kind: input, shape index: {}]
  %s3 = inlined_call_operand.vmem [shape: f32[2,2,1], index: 3, kind: input, shape index: {}]
  %s4 = inlined_call_operand.vmem [shape: f32[2,2,1], index: 4, kind: input, shape index: {}]
  %s5 = inlined_call_operand.hbm [shape: f32[2,2,64], index: 5, kind: output, shape index: {}]
  %s6 = sld [smem:[#allocation0]]
  $region53: #{tpu_custom_call.1} parent=0
    _
  %s8 = ssub.s32 1, %s6
  %s9 = scalar_select 0, %s8, %s6
  $region1: #{tpu_custom_call.1} parent=0
    #allocation2 [shape = 'u8[2048]{0}', space=vmem, size = 0x800, scoped, tag = 'output window, operand 0']
    #allocation3 [shape = 's32[2]{0}', space=sflag, size = 0x8, scoped, tag = 'scoped memory for tpu_custom_call.1']
    %10 = vsyncpa [#allocation3], 0
    %s11 = scalar_lea.sflag [#allocation3], 1
    %12 = vsyncpa %s11, 0
    loop: start=0, step=1, limit=4
    $region2: #{tpu_custom_call.1} parent=1 // loop_pre_header
      _
    $region3: #{tpu_custom_call.1} parent=1 // loop_header
      %s14 = sphi 0, %s18
      %p15 = scmp.ge.s32.totalorder %s14, 4
      %s24 = sphi 0, %s26
      %s27 = sphi 0, %s24
      %s28 = sphi 0, %s27
      %s44 = sphi 0, %s28
      %s50 = sphi 0, %s52
      %s53 = sphi 0, %s50
      %s54 = sphi 0, %s53
      %s70 = sphi 0, %s54
      %s76 = sphi 0, %s78
      %s79 = sphi 0, %s76
      %s80 = sphi 0, %s79
      %s96 = sphi 0, %s80
      %s102 = sphi 0, %s104
      %s105 = sphi 0, %s102
      %s106 = sphi 0, %s105
      %s122 = sphi 0, %s106
      %s128 = sphi 0, %s130
      %s131 = sphi 0, %s128
      %s132 = sphi 0, %s131
      %s148 = sphi 0, %s132
      %s154 = sphi 0, %s156
      %s157 = sphi 0, %s154
      %s158 = sphi 0, %s157
      %s174 = sphi 0, %s158
    $region4: #{tpu_custom_call.1} parent=1 // loop_header_branch
      %17 = sbr.rel (%p15) target = $region8
    $region5: #{tpu_custom_call.1} parent=1 // loop_body
      %s19 = ssub.s32 %s14, 1
      %s20 = ssub.s32 %s14, 2
      %s21 = sadd.s32 %s14, 1
      %s22 = ssub.s32 %s14, %s21
      %p23 = scmp.eq.s32.totalorder %s22, 0
      %s25 = sadd.s32 %s24, 1
      %s26 = scalar_select %p23, %s24, %s25
      %p29 = pneg %p23
      %p30 = scmp.eq.s32.totalorder %s14, 1
      %p31 = por %p29, %p30
      %p32 = scmp.ne.s32.totalorder %s24, %s27
      %p33 = scmp.eq.s32.totalorder %s14, 0
      %p34 = por %p32, %p33
      %p35 = scmp.ne.s32.totalorder %s24, %s27
      %p36 = scmp.eq.s32.totalorder %s19, 1
      %p37 = por %p35, %p36
      %p38 = scmp.ne.s32.totalorder %s27, %s28
      %p39 = scmp.eq.s32.totalorder %s19, 0
      %p40 = por %p38, %p39
      %p41 = scmp.ne.s32.totalorder %s27, %s28
      %p42 = scmp.eq.s32.totalorder %s20, 1
      %p43 = por %p41, %p42
      %p45 = scmp.ne.s32.totalorder %s28, %s44
      %p46 = scmp.eq.s32.totalorder %s20, 0
      %p47 = por %p45, %p46
      %s48 = ssub.s32 %s14, %s21
      %p49 = scmp.eq.s32.totalorder %s48, 0
      %s51 = sadd.s32 %s50, 1
      %s52 = scalar_select %p49, %s50, %s51
      %p55 = pneg %p49
      %p56 = scmp.eq.s32.totalorder %s14, 1
      %p57 = por %p55, %p56
      %p58 = scmp.ne.s32.totalorder %s50, %s53
      %p59 = scmp.eq.s32.totalorder %s14, 0
      %p60 = por %p58, %p59
      %p61 = scmp.ne.s32.totalorder %s50, %s53
      %p62 = scmp.eq.s32.totalorder %s19, 1
      %p63 = por %p61, %p62
      %p64 = scmp.ne.s32.totalorder %s53, %s54
      %p65 = scmp.eq.s32.totalorder %s19, 0
      %p66 = por %p64, %p65
      %p67 = scmp.ne.s32.totalorder %s53, %s54
      %p68 = scmp.eq.s32.totalorder %s20, 1
      %p69 = por %p67, %p68
      %p71 = scmp.ne.s32.totalorder %s54, %s70
      %p72 = scmp.eq.s32.totalorder %s20, 0
      %p73 = por %p71, %p72
      %s74 = ssub.s32 %s14, %s21
      %p75 = scmp.eq.s32.totalorder %s74, 0
      %s77 = sadd.s32 %s76, 1
      %s78 = scalar_select %p75, %s76, %s77
      %p81 = pneg %p75
      %p82 = scmp.eq.s32.totalorder %s14, 1
      %p83 = por %p81, %p82
      %p84 = scmp.ne.s32.totalorder %s76, %s79
      %p85 = scmp.eq.s32.totalorder %s14, 0
      %p86 = por %p84, %p85
      %p87 = scmp.ne.s32.totalorder %s76, %s79
      %p88 = scmp.eq.s32.totalorder %s19, 1
      %p89 = por %p87, %p88
      %p90 = scmp.ne.s32.totalorder %s79, %s80
      %p91 = scmp.eq.s32.totalorder %s19, 0
      %p92 = por %p90, %p91
      %p93 = scmp.ne.s32.totalorder %s79, %s80
      %p94 = scmp.eq.s32.totalorder %s20, 1
      %p95 = por %p93, %p94
      %p97 = scmp.ne.s32.totalorder %s80, %s96
      %p98 = scmp.eq.s32.totalorder %s20, 0
      %p99 = por %p97, %p98
      %s100 = ssub.s32 %s14, %s21
      %p101 = scmp.eq.s32.totalorder %s100, 0
      %s103 = sadd.s32 %s102, 1
      %s104 = scalar_select %p101, %s102, %s103
      %p107 = pneg %p101
      %p108 = scmp.eq.s32.totalorder %s14, 1
      %p109 = por %p107, %p108
      %p110 = scmp.ne.s32.totalorder %s102, %s105
      %p111 = scmp.eq.s32.totalorder %s14, 0
      %p112 = por %p110, %p111
      %p113 = scmp.ne.s32.totalorder %s102, %s105
      %p114 = scmp.eq.s32.totalorder %s19, 1
      %p115 = por %p113, %p114
      %p116 = scmp.ne.s32.totalorder %s105, %s106
      %p117 = scmp.eq.s32.totalorder %s19, 0
      %p118 = por %p116, %p117
      %p119 = scmp.ne.s32.totalorder %s105, %s106
      %p120 = scmp.eq.s32.totalorder %s20, 1
      %p121 = por %p119, %p120
      %p123 = scmp.ne.s32.totalorder %s106, %s122
      %p124 = scmp.eq.s32.totalorder %s20, 0
      %p125 = por %p123, %p124
      %s126 = ssub.s32 %s14, %s21
      %p127 = scmp.eq.s32.totalorder %s126, 0
      %s129 = sadd.s32 %s128, 1
      %s130 = scalar_select %p127, %s128, %s129
      %p133 = pneg %p127
      %p134 = scmp.eq.s32.totalorder %s14, 1
      %p135 = por %p133, %p134
      %p136 = scmp.ne.s32.totalorder %s128, %s131
      %p137 = scmp.eq.s32.totalorder %s14, 0
      %p138 = por %p136, %p137
      %p139 = scmp.ne.s32.totalorder %s128, %s131
      %p140 = scmp.eq.s32.totalorder %s19, 1
      %p141 = por %p139, %p140
      %p142 = scmp.ne.s32.totalorder %s131, %s132
      %p143 = scmp.eq.s32.totalorder %s19, 0
      %p144 = por %p142, %p143
      %p145 = scmp.ne.s32.totalorder %s131, %s132
      %p146 = scmp.eq.s32.totalorder %s20, 1
      %p147 = por %p145, %p146
      %p149 = scmp.ne.s32.totalorder %s132, %s148
      %p150 = scmp.eq.s32.totalorder %s20, 0
      %p151 = por %p149, %p150
      %s152 = ssub.s32 %s14, %s21
      %p153 = scmp.eq.s32.totalorder %s152, 0
      %s155 = sadd.s32 %s154, 1
      %s156 = scalar_select %p153, %s154, %s155
      %p159 = pneg %p153
      %p160 = scmp.eq.s32.totalorder %s14, 1
      %p161 = por %p159, %p160
      %p162 = scmp.ne.s32.totalorder %s154, %s157
      %p163 = scmp.eq.s32.totalorder %s14, 0
      %p164 = por %p162, %p163
      %p165 = scmp.ne.s32.totalorder %s154, %s157
      %p166 = scmp.eq.s32.totalorder %s19, 1
      %p167 = por %p165, %p166
      %p168 = scmp.ne.s32.totalorder %s157, %s158
      %p169 = scmp.eq.s32.totalorder %s19, 0
      %p170 = por %p168, %p169
      %p171 = scmp.ne.s32.totalorder %s157, %s158
      %p172 = scmp.eq.s32.totalorder %s20, 1
      %p173 = por %p171, %p172
      %p175 = scmp.ne.s32.totalorder %s158, %s174
      %p176 = scmp.eq.s32.totalorder %s20, 0
      %p177 = por %p175, %p176
      %p178 = scmp.le.s32.totalorder 1, %s14
      %p179 = scmp.lt.s32.totalorder %s14, 3
      %p180 = pnand %p178, %p179
      %p181 = pneg %p180
      // Predicated region
      $region9: #{tpu_custom_call.1} parent=5 // pred_check
        _
      $region10: #{tpu_custom_call.1} parent=5 // pred_check_branch
        %183 = sbr.rel (%p180) target = $region12
      $region11: #{tpu_custom_call.1} parent=5 // pred_region
        %s184 = ssub.s32 %s14, 1
      $region12: #{tpu_custom_call.1} parent=5 // pred_fallthru
        _
      %p185 = scmp.lt.s32.totalorder %s14, 2
      // Predicated region
      $region13: #{tpu_custom_call.1} parent=5 // pred_check
        %p186 = pneg %p185
      $region14: #{tpu_custom_call.1} parent=5 // pred_check_branch
        %188 = sbr.rel (%p186) target = $region16
      $region15: #{tpu_custom_call.1} parent=5 // pred_region
        // Predicated region
        $region17: #{tpu_custom_call.1} parent=15 // pred_check
          %p189 = pneg %p34
        $region18: #{tpu_custom_call.1} parent=15 // pred_check_branch
          %191 = sbr.rel (%p189) target = $region20
        $region19: #{tpu_custom_call.1} parent=15 // pred_region
          %p192 = scmp.lt.s32.totalorder %s14, 1
          %s193 = scalar_select %p192, %s14, 1
          %s194 = smul.addr %s193, 4
          %s195 = scalar_lea.vmem %s0, %s194
        $region20: #{tpu_custom_call.1} parent=15 // pred_fallthru
          _
        // Predicated region
        $region21: #{tpu_custom_call.1} parent=15 // pred_check
          %p196 = pneg %p60
        $region22: #{tpu_custom_call.1} parent=15 // pred_check_branch
          %198 = sbr.rel (%p196) target = $region24
        $region23: #{tpu_custom_call.1} parent=15 // pred_region
          %p199 = scmp.lt.s32.totalorder %s14, 1
          %s200 = scalar_select %p199, %s14, 1
          %s201 = smul.addr %s200, 4
          %s202 = scalar_lea.vmem %s1, %s201
        $region24: #{tpu_custom_call.1} parent=15 // pred_fallthru
          _
        // Predicated region
        $region25: #{tpu_custom_call.1} parent=15 // pred_check
          %p203 = pneg %p86
        $region26: #{tpu_custom_call.1} parent=15 // pred_check_branch
          %205 = sbr.rel (%p203) target = $region28
        $region27: #{tpu_custom_call.1} parent=15 // pred_region
          %p206 = scmp.lt.s32.totalorder %s14, 1
          %s207 = scalar_select %p206, %s14, 1
          %s208 = smul.addr %s207, 4
          %s209 = scalar_lea.vmem %s2, %s208
        $region28: #{tpu_custom_call.1} parent=15 // pred_fallthru
          _
        // Predicated region
        $region29: #{tpu_custom_call.1} parent=15 // pred_check
          %p210 = pneg %p112
        $region30: #{tpu_custom_call.1} parent=15 // pred_check_branch
          %212 = sbr.rel (%p210) target = $region32
        $region31: #{tpu_custom_call.1} parent=15 // pred_region
          %p213 = scmp.lt.s32.totalorder %s14, 1
          %s214 = scalar_select %p213, %s14, 1
          %s215 = smul.addr %s214, 2
          %s216 = scalar_lea.vmem %s3, %s215
        $region32: #{tpu_custom_call.1} parent=15 // pred_fallthru
          _
        // Predicated region
        $region33: #{tpu_custom_call.1} parent=15 // pred_check
          %p217 = pneg %p138
        $region34: #{tpu_custom_call.1} parent=15 // pred_check_branch
          %219 = sbr.rel (%p217) target = $region36
        $region35: #{tpu_custom_call.1} parent=15 // pred_region
          %p220 = scmp.lt.s32.totalorder %s14, 1
          %s221 = scalar_select %p220, %s14, 1
          %s222 = smul.addr %s221, 2
          %s223 = scalar_lea.vmem %s4, %s222
        $region36: #{tpu_custom_call.1} parent=15 // pred_fallthru
          _
      $region16: #{tpu_custom_call.1} parent=5 // pred_fallthru
        _
      %p224 = scmp.le.s32.totalorder 1, %s14
      %p225 = scmp.lt.s32.totalorder %s14, 3
      %p226 = pnand %p224, %p225
      %p227 = pneg %p226
      // Predicated region
      $region37: #{tpu_custom_call.1} parent=5 // pred_check
        _
      $region38: #{tpu_custom_call.1} parent=5 // pred_check_branch
        %229 = sbr.rel (%p226) target = $region40
      $region39: #{tpu_custom_call.1} parent=5 // pred_region
        %s230 = ssub.s32 %s14, 1
        %p231 = scmp.lt.s32.totalorder %s19, 1
        %s232 = scalar_select %p231, %s19, 1
        %s233 = smul.addr %s232, 4
        %s234 = scalar_lea.vmem %s0, %s233
        %p235 = pneg %p40
        %p236 = pneg %p37
        %p237 = scmp.lt.s32.totalorder %s19, 1
        %s238 = scalar_select %p237, %s19, 1
        %s239 = smul.addr %s238, 4
        %s240 = scalar_lea.vmem %s1, %s239
        %p241 = pneg %p66
        %p242 = pneg %p63
        %p243 = scmp.lt.s32.totalorder %s19, 1
        %s244 = scalar_select %p243, %s19, 1
        %s245 = smul.addr %s244, 4
        %s246 = scalar_lea.vmem %s2, %s245
        %p247 = pneg %p92
        %p248 = pneg %p89
        %p249 = scmp.lt.s32.totalorder %s19, 1
        %s250 = scalar_select %p249, %s19, 1
        %s251 = smul.addr %s250, 2
        %s252 = scalar_lea.vmem %s3, %s251
        %p253 = pneg %p118
        %p254 = pneg %p115
        %p255 = scmp.lt.s32.totalorder %s19, 1
        %s256 = scalar_select %p255, %s19, 1
        %s257 = smul.addr %s256, 2
        %s258 = scalar_lea.vmem %s4, %s257
        %p259 = pneg %p144
        %p260 = pneg %p141
        %p261 = pneg %p170
        %p262 = pneg %p167
        %s263 = sand.u32 %s157, 1
        %s264 = scalar_lea.sflag [#allocation3], %s263
        %s265 = sand.u32 %s157, 1
        %s266 = smul.addr %s265, 2
        %s267 = scalar_lea.vmem [#allocation2], %s266
        %p268 = scmp.lt.s32.totalorder %s19, 1
        %s269 = scalar_select %p268, %s19, 1
        %s270 = smul.addr %s269, 4
        %s271 = scalar_lea.vmem %s0, %s270
        %p272 = scmp.lt.s32.totalorder %s19, 1
        %s273 = scalar_select %p272, %s19, 1
        %s274 = smul.addr %s273, 4
        %s275 = scalar_lea.vmem %s1, %s274
        %p276 = scmp.lt.s32.totalorder %s19, 1
        %s277 = scalar_select %p276, %s19, 1
        %s278 = smul.addr %s277, 4
        %s279 = scalar_lea.vmem %s2, %s278
        %p280 = scmp.lt.s32.totalorder %s19, 1
        %s281 = scalar_select %p280, %s19, 1
        %s282 = smul.addr %s281, 2
        %s283 = scalar_lea.vmem %s3, %s282
        %p284 = scmp.lt.s32.totalorder %s19, 1
        %s285 = scalar_select %p284, %s19, 1
        %s286 = smul.addr %s285, 2
        %s287 = scalar_lea.vmem %s4, %s286
        %v288 = vld [vmem:[%s271] sm:$0x7]
        %v289 = vld [vmem:[%s275] sm:$0x7]
        %v290 = vld [vmem:[%s279] sm:$0x7]
        %v291 = vld [vmem:[%s283] sm:$0x3]
        %v292 = vld [vmem:[%s287] sm:$0x3]
        %294 = vset.pattern.permute.xlu0 0
        %295 = vperm.xlu0 %294, %v289
        %v296 = vpop.permute.xlu0 %295
        %v298 = vmul.f32 %v296, %v288
        %299 = vset.pattern.permute.xlu0 1
        %300 = vperm.xlu0 %299, %v289
        %v301 = vpop.permute.xlu0 %300
        %v304 = vrot.slane %v288, 1
        %v306 = vmul.f32 %v301, %v304
        %v307 = vadd.f32 %v298, %v306
        %308 = vset.pattern.permute.xlu0 2
        %309 = vperm.xlu0 %308, %v289
        %v310 = vpop.permute.xlu0 %309
        %v312 = vrot.slane %v288, 2
        %v314 = vmul.f32 %v310, %v312
        %v315 = vadd.f32 %v307, %v314
        %317 = vset.pattern.permute.xlu0 0
        %318 = vperm.xlu0 %317, %v290
        %v319 = vpop.permute.xlu0 %318
        %v321 = vadd.f32 %v315, %v319
        %v322 = vrot.slane %v288, 7
        %v324 = vmul.f32 %v296, %v322
        %v325 = vmul.f32 %v301, %v288
        %v326 = vadd.f32 %v324, %v325
        %v327 = vmul.f32 %v310, %v304
        %v328 = vadd.f32 %v326, %v327
        %v329 = vadd.f32 %v328, %v319
        %v330 = vrot.slane %v288, 6
        %v332 = vmul.f32 %v296, %v330
        %v333 = vmul.f32 %v301, %v322
        %v334 = vadd.f32 %v332, %v333
        %v335 = vmul.f32 %v310, %v288
        %v336 = vadd.f32 %v334, %v335
        %v337 = vadd.f32 %v336, %v319
        %v338 = vrcp.pop %v337
        %v339 = vmul.f32 %v337, %v338
        %v340 = vsub.f32 1.0, %v339
        %v341 = vmul.f32 %v338, %v340
        %v342 = vadd.f32 %v338, %v341
        %vm343 = vweird.f32 %v337
        %vm344 = vweird.f32 %v338
        %vm345 = vmor %vm343, %vm344
        %v346 = vsel %vm345, %v338, %v342
        %v347 = vand.u32 2147483647, %v337
        %vm348 = vcmp.eq.f32.partialorder %v347, 8.507059e+37
        %v349 = vand.u32 %v337, 2147483648
        %v350 = vor.u32 1.1754944e-38, %v349
        %v351 = vsel %vm348, %v350, %v346
        %v353 = vrot.slane %v351, 2
        %v355 = vmul.f32 %v321, %v353
        %357 = vset.pattern.permute.xlu0 0
        %358 = vperm.xlu0 %357, %v291
        %v359 = vpop.permute.xlu0 %358
        %v361 = vmul.f32 %v355, %v359
        %363 = vset.pattern.permute.xlu0 0
        %364 = vperm.xlu0 %363, %v292
        %v365 = vpop.permute.xlu0 %364
        %v367 = vadd.f32 %v361, %v365
        %v368 = vrot.slane %v351, 1
        %v370 = vmul.f32 %v329, %v368
        %v371 = vmul.f32 %v370, %v359
        %v372 = vadd.f32 %v371, %v365
        %vm373 = vcmask 516096
        %374 = vst.msk [vmem:[%s267] sm:$0x1] %vm373, %v367
        %vm375 = vcmask 517121
        %376 = vst.msk [vmem:[%s267] sm:$0x2] %vm375, %v372
        %s377 = sand.u32 %s157, 1
        %s378 = scalar_lea.sflag [#allocation3], %s377
        %s379 = sand.u32 %s157, 1
        %s380 = smul.addr %s379, 2
        %s381 = scalar_lea.vmem [#allocation2], %s380
        // Predicated region
        $region41: #{tpu_custom_call.1} parent=39 // pred_check
          %p382 = pneg %p167
        $region42: #{tpu_custom_call.1} parent=39 // pred_check_branch
          %384 = sbr.rel (%p382) target = $region44
        $region43: #{tpu_custom_call.1} parent=39 // pred_region
          %386 = vsyncadd %s378, 0
          %s387 = smul.addr %s19, 2
          %s388 = scalar_lea.hbm %s5, %s387
          %s390 = sshll.u32 %s381, 4
          %s391 = int_to_ptr.vmem [resolvable:$true] %s390
          %s392 = sshll.u32 %s388, 4
          %s393 = int_to_ptr.hbm [resolvable:$true] %s392
          %395 = dma.vmem_to_hbm [thread:$0]  %s391, 32, %s393, %s378
        $region44: #{tpu_custom_call.1} parent=39 // pred_fallthru
          _
      $region40: #{tpu_custom_call.1} parent=5 // pred_fallthru
        _
      %p396 = scmp.le.s32.totalorder 2, %s14
      // Predicated region
      $region45: #{tpu_custom_call.1} parent=5 // pred_check
        %p397 = pneg %p396
      $region46: #{tpu_custom_call.1} parent=5 // pred_check_branch
        %399 = sbr.rel (%p397) target = $region48
      $region47: #{tpu_custom_call.1} parent=5 // pred_region
        %s400 = ssub.s32 %s14, 2
        // Predicated region
        $region49: #{tpu_custom_call.1} parent=47 // pred_check
          %p401 = pneg %p173
        $region50: #{tpu_custom_call.1} parent=47 // pred_check_branch
          %403 = sbr.rel (%p401) target = $region52
        $region51: #{tpu_custom_call.1} parent=47 // pred_region
          %s404 = sand.u32 %s158, 1
          %s405 = scalar_lea.sflag [#allocation3], %s404
          %s406 = sand.u32 %s158, 1
          %s407 = smul.addr %s406, 2
          %s408 = scalar_lea.vmem [#allocation2], %s407
          %410 = dma.done %s405, 32
        $region52: #{tpu_custom_call.1} parent=47 // pred_fallthru
          _
      $region48: #{tpu_custom_call.1} parent=5 // pred_fallthru
        _
    $region6: #{tpu_custom_call.1} parent=1 // loop_footer
      %s18 = sadd.s32 1, %s14
    $region7: #{tpu_custom_call.1} parent=1 // loop_footer_branch
      %13 = sbr.rel target = $region3
    $region8: #{tpu_custom_call.1} parent=1 // loop_exit
      _
    %411 = vsyncpa [#allocation3], 1
    %s412 = scalar_lea.sflag [#allocation3], 1
    %413 = vsyncpa %s412, 1

</llo_original>
